<compile_context>
chip_gen: v7x
topology: tpu7x:2x2x1
jax: 0.10.0
libtpu: 0.0.40
codegen_flags: <defaults>
</compile_context>

<pallas_src>
import math
import numpy as np
import jax
import jax.numpy as jnp
from jax.experimental import pallas as pl
from jax.experimental.pallas import tpu as pltpu

WINDOW_SIZE = 11
SIGMA = 1.5
PAD = WINDOW_SIZE // 2
C1 = 0.01 ** 2
C2 = 0.03 ** 2


def _gaussian_1d(ws, sigma):
    g = np.array(
        [math.exp(-((x - ws // 2) ** 2) / (2.0 * sigma ** 2)) for x in range(ws)],
        dtype=np.float64,
    )
    return (g / g.sum()).astype(np.float32)


def _banded_conv_matrix(n, w1d, pad):
    """K[src, dst] = w[src - dst + pad] (band clipped at the edges).

    (x @ K)[i, j] = sum_c x[i, c] * w[c - j + pad]  == 1-D zero-padded
    cross-correlation along the last axis.
    """
    K = np.zeros((n, n), dtype=np.float32)
    for dst in range(n):
        for src in range(max(0, dst - pad), min(n, dst + pad + 1)):
            K[src, dst] = w1d[src - dst + pad]
    return K


def _block_diag(block, reps):
    n = block.shape[0]
    out = np.zeros((n * reps, n * reps), dtype=block.dtype)
    for k in range(reps):
        out[k * n:(k + 1) * n, k * n:(k + 1) * n] = block
    return out


def _largest_divisor_leq(n, cap):
    cap = max(1, min(n, cap))
    for d in range(cap, 0, -1):
        if n % d == 0:
            return d
    return 1


def _choose_cblk(G0, Hp, WL, budget_bytes=24 * 1024 * 1024):
    """Largest divisor of G0 whose per-step VMEM footprint fits the budget.

    Keeps G = G0 // CBLK >= 2 when G0 >= 2 (v7x megacore) and bounds the
    static unroll of the in-kernel vertical-group loop.
    """
    pv_cap = max(1, 128 // Hp)

    def footprint(c):
        s = c * Hp * WL * 4
        vblk = _largest_divisor_leq(c, pv_cap)
        t = vblk * Hp
        return (2 * s * 2          # img1 + img2 blocks, double-buffered
                + 5 * s            # staging scratch (5 conv inputs)
                + 5 * s            # horizontal-pass result temporary
                + 12 * t * WL * 4  # per-group mu/sigma/map temporaries
                + 2 * WL * WL * 4  # horizontal band (double-buffered)
                + 2 * t * t * 4)   # vertical band (double-buffered)

    cap = G0 if G0 == 1 else G0 // 2   # keep >= 2 grid steps when possible
    best = 1
    for c in range(1, cap + 1):
        if G0 % c:
            continue
        vblk = _largest_divisor_leq(c, pv_cap)
        if c // vblk > 16:             # bound static unroll in the kernel
            continue
        if footprint(c) <= budget_bytes:
            best = c
    return best


def _make_ssim_kernel(CBLK, VBLK, Hp, H, WL):
    S = CBLK * Hp          # rows per product slab
    T = VBLK * Hp          # rows per vertical-pass group (<= 128)
    NG = CBLK // VBLK      # vertical groups per grid step

    def kernel(kw_ref, kv_ref, i1_ref, i2_ref, out_ref, xs_ref):
        # kw_ref : (WL, WL)   block-diag horizontal Gaussian band (right-mult)
        # kv_ref : (T, T)     block-diag vertical Gaussian band  (left-mult)
        # i*_ref : (S, WL)    CBLK lane-packed planes (plane-major rows)
        # out_ref: (1, 8, 128) lane-dense per-step partial-sum tile
        # xs_ref : (5*S, WL)  VMEM staging for the five conv inputs
        a = i1_ref[...]
        b = i2_ref[...]

        # Stage the five conv inputs directly into sublane slices of the MXU
        # operand buffer (no jnp.concatenate copy).
        xs_ref[0 * S:1 * S, :] = a
        xs_ref[1 * S:2 * S, :] = b
        xs_ref[2 * S:3 * S, :] = a * a
        xs_ref[3 * S:4 * S, :] = b * b
        xs_ref[4 * S:5 * S, :] = a * b

        # Horizontal Gaussian pass: ONE batched MXU matmul over all planes
        # and all five products (M = 5*CBLK*Hp, K = N = WL).
        xh = jnp.dot(xs_ref[...], kw_ref[...],
                     preferred_element_type=jnp.float32)          # (5*S, WL)

        kv = kv_ref[...]

        if Hp != H:
            # Mask rows added by sublane padding (hoisted out of the loop).
            row_in_plane = jax.lax.broadcasted_iota(jnp.int32, (T, WL), 0) % Hp
            valid = row_in_plane < H

        step_sum = jnp.zeros((), dtype=jnp.float32)
        for g in range(NG):          # tiny static unroll (NG <= 16)
            r0 = g * T

            def vconv(slab, _r0=r0):
                lo = slab * S + _r0
                return jnp.dot(kv, xh[lo:lo + T, :],
                               preferred_element_type=jnp.float32)

            mu1, mu2 = vconv(0), vconv(1)
            s11, s22, s12 = vconv(2), vconv(3), vconv(4)

            mu1_sq = mu1 * mu1
            mu2_sq = mu2 * mu2
            mu1_mu2 = mu1 * mu2
            sigma1_sq = s11 - mu1_sq
            sigma2_sq = s22 - mu2_sq
            sigma12 = s12 - mu1_mu2

            num = (2.0 * mu1_mu2 + C1) * (2.0 * sigma12 + C2)
            den = (mu1_sq + mu2_sq + C1) * (sigma1_sq + sigma2_sq + C2)
            # EUP reciprocal + one Newton step (well inside the 1e-3 tolerance).
            r = pl.reciprocal(den, approx=True)
            r = r * (2.0 - den * r)
            smap = num * r
            if Hp != H:
                smap = jnp.where(valid, smap, 0.0)
            step_sum = step_sum + jnp.sum(smap)

        # Lane-dense, unmasked (8,128) store of this step's partial sum.
        out_ref[...] = jnp.full(out_ref.shape, step_sum, dtype=jnp.float32)

    return kernel


def ssim_pallas(img1, img2):
    """size_average=True path of the PyTorch SSIM module."""
    B, C, H, W = img1.shape
    N = B * C
    x1 = img1.astype(jnp.float32).reshape(N, H, W)
    x2 = img2.astype(jnp.float32).reshape(N, H, W)

    # ---- Lane packing: put P planes side by side along lanes (WL = P*W). ----
    P = _largest_divisor_leq(N, max(1, 128 // W))
    G0 = N // P
    WL = P * W

    def widen(x):
        return x.reshape(G0, P, H, W).transpose(0, 2, 1, 3).reshape(G0, H, WL)

    x1w, x2w = widen(x1), widen(x2)

    # ---- Pad rows to a multiple of 8 (vreg sublane alignment). ----
    Hp = ((H + 7) // 8) * 8
    if Hp != H:
        padding = ((0, 0), (0, Hp - H), (0, 0))
        x1w = jnp.pad(x1w, padding)
        x2w = jnp.pad(x2w, padding)

    x1f = x1w.reshape(G0 * Hp, WL)
    x2f = x2w.reshape(G0 * Hp, WL)

    # ---- Band matrices (zero padding baked into the clipped bands). ----
    w1d = _gaussian_1d(WINDOW_SIZE, SIGMA)
    kw = jnp.asarray(_block_diag(_banded_conv_matrix(W, w1d, PAD), P))   # (WL, WL)

    CBLK = _choose_cblk(G0, Hp, WL)
    VBLK = _largest_divisor_leq(CBLK, max(1, 128 // Hp))
    G = G0 // CBLK
    T = VBLK * Hp
    kv = jnp.asarray(_block_diag(_banded_conv_matrix(Hp, w1d, PAD).T, VBLK))  # (T, T)

    out = pl.pallas_call(
        _make_ssim_kernel(CBLK, VBLK, Hp, H, WL),
        out_shape=jax.ShapeDtypeStruct((G, 8, 128), jnp.float32),
        grid_spec=pltpu.PrefetchScalarGridSpec(
            num_scalar_prefetch=0,
            grid=(G,),
            in_specs=[
                # Constant band matrices: constant index_map -> only fetched
                # at step 0 (see TODO above for dropping the second buffer).
                pl.BlockSpec((WL, WL), lambda g: (0, 0)),
                pl.BlockSpec((T, T), lambda g: (0, 0)),
                pl.BlockSpec((CBLK * Hp, WL), lambda g: (g, 0)),
                pl.BlockSpec((CBLK * Hp, WL), lambda g: (g, 0)),
            ],
            out_specs=pl.BlockSpec((1, 8, 128), lambda g: (g, 0, 0)),
            scratch_shapes=[pltpu.VMEM((5 * CBLK * Hp, WL), jnp.float32)],
        ),
        compiler_params=pltpu.CompilerParams(
            dimension_semantics=("parallel",),
            vmem_limit_bytes=48 * 1024 * 1024,
        ),
    )(kw, kv, x1f, x2f)

    # Final reduction of the per-step partial sums in plain JAX.
    total = jnp.sum(out[:, 0, 0])
    return total / float(N * H * W)


def ssim_ref(img1, img2):
    """Plain-JAX reference (grouped conv), mirrors the PyTorch code."""
    B, C, H, W = img1.shape
    w1d = jnp.asarray(_gaussian_1d(WINDOW_SIZE, SIGMA))
    w2d = jnp.outer(w1d, w1d)
    window = jnp.broadcast_to(w2d, (C, 1, WINDOW_SIZE, WINDOW_SIZE))

    def conv(x):
        return jax.lax.conv_general_dilated(
            x, window, (1, 1), [(PAD, PAD), (PAD, PAD)],
            dimension_numbers=("NCHW", "OIHW", "NCHW"),
            feature_group_count=C)

    mu1, mu2 = conv(img1), conv(img2)
    mu1_sq, mu2_sq, mu1_mu2 = mu1 * mu1, mu2 * mu2, mu1 * mu2
    sigma1_sq = conv(img1 * img1) - mu1_sq
    sigma2_sq = conv(img2 * img2) - mu2_sq
    sigma12 = conv(img1 * img2) - mu1_mu2
    ssim_map = ((2 * mu1_mu2 + C1) * (2 * sigma12 + C2)) / (
        (mu1_sq + mu2_sq + C1) * (sigma1_sq + sigma2_sq + C2))
    return ssim_map.mean()


if __name__ == "__main__":
    key = jax.random.PRNGKey(0)
    k1, k2 = jax.random.split(key)
    B, C, H, W = 2, 4, 16, 16
    img1 = jax.random.uniform(k1, (B, C, H, W), dtype=jnp.float32)
    img2 = jax.random.uniform(k2, (B, C, H, W), dtype=jnp.float32)

    out = ssim_pallas(img1, img2)
    out = jax.block_until_ready(out)

    ref = jax.block_until_ready(ssim_ref(img1, img2))
    np.testing.assert_allclose(np.asarray(out), np.asarray(ref),
                               rtol=1e-3, atol=1e-3)
    print("KERNEL_OK")
</pallas_src>

<mosaic_0001>
module attributes {stable_mosaic.version = 11 : i64} {
  func.func @kernel(%arg0: i32, %arg1: memref<128x128xf32, #tpu.memory_space<vmem>>, %arg2: memref<16x16xf32, #tpu.memory_space<vmem>>, %arg3: memref<16x128xf32, #tpu.memory_space<vmem>>, %arg4: memref<16x128xf32, #tpu.memory_space<vmem>>, %arg5: memref<1x8x128xf32, #tpu.memory_space<vmem>>, %arg6: memref<80x128xf32, #tpu.memory_space<vmem>>) attributes {dimension_semantics = [#tpu.dimension_semantics<parallel>], iteration_bounds = array<i64: 1>, scalar_prefetch = 0 : i64, scratch_operands = 1 : i64, tpu.core_type = #tpu.core_type<tc>, window_params = [{pipeline_mode = #tpu.pipeline_mode<synchronous>, transform_indices = @transform_0, window_bounds = array<i64: 128, 128>}, {pipeline_mode = #tpu.pipeline_mode<synchronous>, transform_indices = @transform_1, window_bounds = array<i64: 16, 16>}, {transform_indices = @transform_2, window_bounds = array<i64: 16, 128>}, {transform_indices = @transform_3, window_bounds = array<i64: 16, 128>}, {transform_indices = @transform_4, window_bounds = array<i64: 1, 8, 128>}]} {
    %c0 = arith.constant 0 : index
    %c0_0 = arith.constant 0 : index
    %0 = vector.load %arg3[%c0, %c0_0] : memref<16x128xf32, #tpu.memory_space<vmem>>, vector<16x128xf32>
    %c0_1 = arith.constant 0 : index
    %c0_2 = arith.constant 0 : index
    %1 = vector.load %arg4[%c0_1, %c0_2] : memref<16x128xf32, #tpu.memory_space<vmem>>, vector<16x128xf32>
    %c0_3 = arith.constant 0 : index
    %c0_4 = arith.constant 0 : index
    %2 = vector.load %arg6[%c0_3, %c0_4] : memref<80x128xf32, #tpu.memory_space<vmem>>, vector<16x128xf32>
    tpu.vector_store %arg6[%c0_3, %c0_4], %0 {strides = array<i32>} : memref<80x128xf32, #tpu.memory_space<vmem>>, vector<16x128xf32>,
    %c16 = arith.constant 16 : index
    %c0_5 = arith.constant 0 : index
    %3 = vector.load %arg6[%c16, %c0_5] : memref<80x128xf32, #tpu.memory_space<vmem>>, vector<16x128xf32>
    tpu.vector_store %arg6[%c16, %c0_5], %1 {strides = array<i32>} : memref<80x128xf32, #tpu.memory_space<vmem>>, vector<16x128xf32>,
    %4 = arith.mulf %0, %0 : vector<16x128xf32>
    %c32 = arith.constant 32 : index
    %c0_6 = arith.constant 0 : index
    %5 = vector.load %arg6[%c32, %c0_6] : memref<80x128xf32, #tpu.memory_space<vmem>>, vector<16x128xf32>
    tpu.vector_store %arg6[%c32, %c0_6], %4 {strides = array<i32>} : memref<80x128xf32, #tpu.memory_space<vmem>>, vector<16x128xf32>,
    %6 = arith.mulf %1, %1 : vector<16x128xf32>
    %c48 = arith.constant 48 : index
    %c0_7 = arith.constant 0 : index
    %7 = vector.load %arg6[%c48, %c0_7] : memref<80x128xf32, #tpu.memory_space<vmem>>, vector<16x128xf32>
    tpu.vector_store %arg6[%c48, %c0_7], %6 {strides = array<i32>} : memref<80x128xf32, #tpu.memory_space<vmem>>, vector<16x128xf32>,
    %8 = arith.mulf %0, %1 : vector<16x128xf32>
    %c64 = arith.constant 64 : index
    %c0_8 = arith.constant 0 : index
    %9 = vector.load %arg6[%c64, %c0_8] : memref<80x128xf32, #tpu.memory_space<vmem>>, vector<16x128xf32>
    tpu.vector_store %arg6[%c64, %c0_8], %8 {strides = array<i32>} : memref<80x128xf32, #tpu.memory_space<vmem>>, vector<16x128xf32>,
    %c0_9 = arith.constant 0 : index
    %c0_10 = arith.constant 0 : index
    %10 = vector.load %arg6[%c0_9, %c0_10] : memref<80x128xf32, #tpu.memory_space<vmem>>, vector<80x128xf32>
    %c0_11 = arith.constant 0 : index
    %c0_12 = arith.constant 0 : index
    %11 = vector.load %arg1[%c0_11, %c0_12] : memref<128x128xf32, #tpu.memory_space<vmem>>, vector<128x128xf32>
    %cst = arith.constant dense<0.000000e+00> : vector<80x128xf32>
    %12 = tpu.matmul %10, %11, %cst {dimension_numbers = #tpu.dot_dimension_numbers<[1], [0], [0], [1], [0, 0, 1, 1], [], []>} : vector<80x128xf32>, vector<128x128xf32>, vector<80x128xf32> -> vector<80x128xf32>
    %c0_13 = arith.constant 0 : index
    %c0_14 = arith.constant 0 : index
    %13 = vector.load %arg2[%c0_13, %c0_14] : memref<16x16xf32, #tpu.memory_space<vmem>>, vector<16x16xf32>
    %14 = vector.extract_strided_slice %12 {offsets = [0, 0], sizes = [16, 128], strides = [1, 1]} : vector<80x128xf32> to vector<16x128xf32>
    %cst_15 = arith.constant dense<0.000000e+00> : vector<16x128xf32>
    %15 = tpu.matmul %13, %14, %cst_15 {dimension_numbers = #tpu.dot_dimension_numbers<[1], [0], [0], [1], [0, 0, 1, 1], [], []>} : vector<16x16xf32>, vector<16x128xf32>, vector<16x128xf32> -> vector<16x128xf32>
    %16 = vector.extract_strided_slice %12 {offsets = [16, 0], sizes = [16, 128], strides = [1, 1]} : vector<80x128xf32> to vector<16x128xf32>
    %cst_16 = arith.constant dense<0.000000e+00> : vector<16x128xf32>
    %17 = tpu.matmul %13, %16, %cst_16 {dimension_numbers = #tpu.dot_dimension_numbers<[1], [0], [0], [1], [0, 0, 1, 1], [], []>} : vector<16x16xf32>, vector<16x128xf32>, vector<16x128xf32> -> vector<16x128xf32>
    %18 = vector.extract_strided_slice %12 {offsets = [32, 0], sizes = [16, 128], strides = [1, 1]} : vector<80x128xf32> to vector<16x128xf32>
    %cst_17 = arith.constant dense<0.000000e+00> : vector<16x128xf32>
    %19 = tpu.matmul %13, %18, %cst_17 {dimension_numbers = #tpu.dot_dimension_numbers<[1], [0], [0], [1], [0, 0, 1, 1], [], []>} : vector<16x16xf32>, vector<16x128xf32>, vector<16x128xf32> -> vector<16x128xf32>
    %20 = vector.extract_strided_slice %12 {offsets = [48, 0], sizes = [16, 128], strides = [1, 1]} : vector<80x128xf32> to vector<16x128xf32>
    %cst_18 = arith.constant dense<0.000000e+00> : vector<16x128xf32>
    %21 = tpu.matmul %13, %20, %cst_18 {dimension_numbers = #tpu.dot_dimension_numbers<[1], [0], [0], [1], [0, 0, 1, 1], [], []>} : vector<16x16xf32>, vector<16x128xf32>, vector<16x128xf32> -> vector<16x128xf32>
    %22 = vector.extract_strided_slice %12 {offsets = [64, 0], sizes = [16, 128], strides = [1, 1]} : vector<80x128xf32> to vector<16x128xf32>
    %cst_19 = arith.constant dense<0.000000e+00> : vector<16x128xf32>
    %23 = tpu.matmul %13, %22, %cst_19 {dimension_numbers = #tpu.dot_dimension_numbers<[1], [0], [0], [1], [0, 0, 1, 1], [], []>} : vector<16x16xf32>, vector<16x128xf32>, vector<16x128xf32> -> vector<16x128xf32>
    %24 = arith.mulf %15, %15 : vector<16x128xf32>
    %25 = arith.mulf %17, %17 : vector<16x128xf32>
    %26 = arith.mulf %15, %17 : vector<16x128xf32>
    %27 = arith.subf %19, %24 : vector<16x128xf32>
    %28 = arith.subf %21, %25 : vector<16x128xf32>
    %29 = arith.subf %23, %26 : vector<16x128xf32>
    %cst_20 = arith.constant 2.000000e+00 : f32
    %30 = vector.broadcast %cst_20 : f32 to vector<16x128xf32>
    %31 = arith.mulf %30, %26 : vector<16x128xf32>
    %cst_21 = arith.constant 9.99999974E-5 : f32
    %32 = vector.broadcast %cst_21 : f32 to vector<16x128xf32>
    %33 = arith.addf %31, %32 : vector<16x128xf32>
    %cst_22 = arith.constant 2.000000e+00 : f32
    %34 = vector.broadcast %cst_22 : f32 to vector<16x128xf32>
    %35 = arith.mulf %34, %29 : vector<16x128xf32>
    %cst_23 = arith.constant 8.99999984E-4 : f32
    %36 = vector.broadcast %cst_23 : f32 to vector<16x128xf32>
    %37 = arith.addf %35, %36 : vector<16x128xf32>
    %38 = arith.mulf %33, %37 : vector<16x128xf32>
    %39 = arith.addf %24, %25 : vector<16x128xf32>
    %cst_24 = arith.constant 9.99999974E-5 : f32
    %40 = vector.broadcast %cst_24 : f32 to vector<16x128xf32>
    %41 = arith.addf %39, %40 : vector<16x128xf32>
    %42 = arith.addf %27, %28 : vector<16x128xf32>
    %cst_25 = arith.constant 8.99999984E-4 : f32
    %43 = vector.broadcast %cst_25 : f32 to vector<16x128xf32>
    %44 = arith.addf %42, %43 : vector<16x128xf32>
    %45 = arith.mulf %41, %44 : vector<16x128xf32>
    %46 = tpu.reciprocal %45 {approx = true} : vector<16x128xf32> -> vector<16x128xf32>
    %47 = arith.mulf %45, %46 : vector<16x128xf32>
    %cst_26 = arith.constant 2.000000e+00 : f32
    %48 = vector.broadcast %cst_26 : f32 to vector<16x128xf32>
    %49 = arith.subf %48, %47 : vector<16x128xf32>
    %50 = arith.mulf %46, %49 : vector<16x128xf32>
    %51 = arith.mulf %38, %50 : vector<16x128xf32>
    %52 = vector.shape_cast %51 : vector<16x128xf32> to vector<1x16x128xf32>
    %cst_27 = arith.constant dense<0.000000e+00> : vector<1xf32>
    %53 = vector.multi_reduction <add>, %52, %cst_27 [1, 2] : vector<1x16x128xf32> to vector<1xf32>
    %54 = vector.shape_cast %53 : vector<1xf32> to vector<1x1x1xf32>
    %55 = vector.extract %54[0, 0, 0] : f32 from vector<1x1x1xf32>
    %cst_28 = arith.constant 0.000000e+00 : f32
    %56 = arith.addf %cst_28, %55 : f32
    %57 = vector.broadcast %56 : f32 to vector<1x8x128xf32>
    %c0_29 = arith.constant 0 : index
    %c0_30 = arith.constant 0 : index
    %c0_31 = arith.constant 0 : index
    %58 = vector.load %arg5[%c0_29, %c0_30, %c0_31] : memref<1x8x128xf32, #tpu.memory_space<vmem>>, vector<1x8x128xf32>
    tpu.vector_store %arg5[%c0_29, %c0_30, %c0_31], %57 {strides = array<i32>} : memref<1x8x128xf32, #tpu.memory_space<vmem>>, vector<1x8x128xf32>,
    return
  }
  func.func @transform_0(%arg0: i32) -> (i32, i32) {
    %c0_i32 = arith.constant 0 : i32
    %c0_i32_0 = arith.constant 0 : i32
    %c0_i32_1 = arith.constant 0 : i32
    return %c0_i32, %c0_i32_0 : i32, i32
  }
  func.func @transform_1(%arg0: i32) -> (i32, i32) {
    %c0_i32 = arith.constant 0 : i32
    %c0_i32_0 = arith.constant 0 : i32
    %c0_i32_1 = arith.constant 0 : i32
    return %c0_i32, %c0_i32_0 : i32, i32
  }
  func.func @transform_2(%arg0: i32) -> (i32, i32) {
    %c0_i32 = arith.constant 0 : i32
    %c0_i32_0 = arith.constant 0 : i32
    return %arg0, %c0_i32 : i32, i32
  }
  func.func @transform_3(%arg0: i32) -> (i32, i32) {
    %c0_i32 = arith.constant 0 : i32
    %c0_i32_0 = arith.constant 0 : i32
    return %arg0, %c0_i32 : i32, i32
  }
  func.func @transform_4(%arg0: i32) -> (i32, i32, i32) {
    %c0_i32 = arith.constant 0 : i32
    %c0_i32_0 = arith.constant 0 : i32
    %c0_i32_1 = arith.constant 0 : i32
    return %arg0, %c0_i32, %c0_i32_0 : i32, i32, i32
  }
}

</mosaic_0001>

<llo_original>
// kernel: tpu_custom_call.1
$region0: #{tpu_custom_call.1}
  #allocation0 [shape = 'u32[]', space=smem, size = 0x4, offset = 0x4, fixed_abs, tag = 'smem constant byte address 0x4 - core index']
  #allocation1 [shape = 'u32[144,128]{1,0:T(1,128)}', space=vmem, size = 0x12000, scoped, tag = 'internal scratch']
  #allocation2 [shape = 'f32[80,128]{1,0:T(8,128)}', space=vmem, size = 0xa000, scoped, tag = 'scratch operand']
  %s0 = inlined_call_operand.hbm [shape: f32[128,128], index: 0, kind: input, shape index: {}]
  %s1 = inlined_call_operand.hbm [shape: f32[16,16], index: 1, kind: input, shape index: {}]
  %s2 = inlined_call_operand.hbm [shape: f32[16,128], index: 2, kind: input, shape index: {}]
  %s3 = inlined_call_operand.hbm [shape: f32[16,128], index: 3, kind: input, shape index: {}]
  %s4 = inlined_call_operand.hbm [shape: f32[1,8,128], index: 4, kind: output, shape index: {}]
  %s5 = sld [smem:[#allocation0]]
  $region42: #{tpu_custom_call.1} parent=0
    _
  %s7 = ssub.s32 1, %s5
  %s8 = scalar_select 0, %s7, %s5
  $region1: #{tpu_custom_call.1} parent=0
    #allocation3 [shape = 'u8[65536]{0}', space=vmem, size = 0x10000, scoped, tag = 'input window, operand 0, single buffered']
    #allocation4 [shape = 's32[1]{0}', space=sflag, size = 0x4, scoped, tag = 'scoped memory for tpu_custom_call.1']
    #allocation5 [shape = 's32[1]{0}', space=sflag, size = 0x4, scoped, tag = 'scoped memory for tpu_custom_call.1']
    #allocation6 [shape = 'u8[8192]{0}', space=vmem, size = 0x2000, scoped, tag = 'input window, operand 1, single buffered']
    #allocation7 [shape = 's32[1]{0}', space=sflag, size = 0x4, scoped, tag = 'scoped memory for tpu_custom_call.1']
    #allocation8 [shape = 'u8[8192]{0}', space=vmem, size = 0x2000, scoped, tag = 'input window, operand 2, single buffered']
    #allocation9 [shape = 'u8[8192]{0}', space=vmem, size = 0x2000, scoped, tag = 'input window, operand 3, single buffered']
    #allocation10 [shape = 's32[1]{0}', space=sflag, size = 0x4, scoped, tag = 'scoped memory for tpu_custom_call.1']
    #allocation11 [shape = 'u8[4096]{0}', space=vmem, size = 0x1000, scoped, tag = 'output window, operand 0, single buffered']
    %9 = vsyncpa [#allocation4], 0
    %10 = vsyncpa [#allocation7], 0
    %11 = vsyncpa [#allocation10], 0
    %12 = vsyncpa [#allocation5], 0
    // Predicated region
    $region2: #{tpu_custom_call.1} parent=1 // pred_check
      _
    $region3: #{tpu_custom_call.1} parent=1 // pred_check_branch
      %14 = sbr.rel (0) target = $region5
    $region4: #{tpu_custom_call.1} parent=1 // pred_region
      %s16 = ssub.s32 2048, 2048
      %17 = vsyncadd [#allocation4], %s16
      %s18 = sshll.u32 [#allocation3], 4
      %s19 = int_to_ptr.vmem [resolvable:$true] %s18
      %24 = dma.hbm_to_vmem [thread:$0]  %s0, 2048, %s19, [#allocation4], 128, 128, 8
    $region5: #{tpu_custom_call.1} parent=1 // pred_fallthru
      _
    // Predicated region
    $region6: #{tpu_custom_call.1} parent=1 // pred_check
      _
    $region7: #{tpu_custom_call.1} parent=1 // pred_check_branch
      %26 = sbr.rel (0) target = $region9
    $region8: #{tpu_custom_call.1} parent=1 // pred_region
      %s28 = ssub.s32 256, 256
      %29 = vsyncadd [#allocation7], %s28
      %s30 = sshll.u32 [#allocation6], 4
      %s31 = int_to_ptr.vmem [resolvable:$true] %s30
      %36 = dma.hbm_to_vmem [thread:$0]  %s1, 256, %s31, [#allocation7], 128, 128, 8
    $region9: #{tpu_custom_call.1} parent=1 // pred_fallthru
      _
    // Predicated region
    $region10: #{tpu_custom_call.1} parent=1 // pred_check
      _
    $region11: #{tpu_custom_call.1} parent=1 // pred_check_branch
      %38 = sbr.rel (0) target = $region13
    $region12: #{tpu_custom_call.1} parent=1 // pred_region
      %s40 = ssub.s32 256, 256
      %41 = vsyncadd [#allocation7], %s40
      %s42 = sshll.u32 [#allocation8], 4
      %s43 = int_to_ptr.vmem [resolvable:$true] %s42
      %48 = dma.hbm_to_vmem [thread:$0]  %s2, 256, %s43, [#allocation7], 128, 128, 8
    $region13: #{tpu_custom_call.1} parent=1 // pred_fallthru
      _
    // Predicated region
    $region14: #{tpu_custom_call.1} parent=1 // pred_check
      _
    $region15: #{tpu_custom_call.1} parent=1 // pred_check_branch
      %50 = sbr.rel (0) target = $region17
    $region16: #{tpu_custom_call.1} parent=1 // pred_region
      %s52 = ssub.s32 256, 256
      %53 = vsyncadd [#allocation10], %s52
      %s54 = sshll.u32 [#allocation9], 4
      %s55 = int_to_ptr.vmem [resolvable:$true] %s54
      %60 = dma.hbm_to_vmem [thread:$0]  %s3, 256, %s55, [#allocation10], 128, 128, 8
    $region17: #{tpu_custom_call.1} parent=1 // pred_fallthru
      _
    // Predicated region
    $region18: #{tpu_custom_call.1} parent=1 // pred_check
      _
    $region19: #{tpu_custom_call.1} parent=1 // pred_check_branch
      %62 = sbr.rel (0) target = $region21
    $region20: #{tpu_custom_call.1} parent=1 // pred_region
      %63 = dma.done [#allocation4], 2048
    $region21: #{tpu_custom_call.1} parent=1 // pred_fallthru
      _
    // Predicated region
    $region22: #{tpu_custom_call.1} parent=1 // pred_check
      _
    $region23: #{tpu_custom_call.1} parent=1 // pred_check_branch
      %65 = sbr.rel (0) target = $region25
    $region24: #{tpu_custom_call.1} parent=1 // pred_region
      %66 = dma.done [#allocation7], 256
    $region25: #{tpu_custom_call.1} parent=1 // pred_fallthru
      _
    // Predicated region
    $region26: #{tpu_custom_call.1} parent=1 // pred_check
      _
    $region27: #{tpu_custom_call.1} parent=1 // pred_check_branch
      %68 = sbr.rel (0) target = $region29
    $region28: #{tpu_custom_call.1} parent=1 // pred_region
      %69 = dma.done [#allocation7], 256
    $region29: #{tpu_custom_call.1} parent=1 // pred_fallthru
      _
    // Predicated region
    $region30: #{tpu_custom_call.1} parent=1 // pred_check
      _
    $region31: #{tpu_custom_call.1} parent=1 // pred_check_branch
      %71 = sbr.rel (0) target = $region33
    $region32: #{tpu_custom_call.1} parent=1 // pred_region
      %72 = dma.done [#allocation10], 256
    $region33: #{tpu_custom_call.1} parent=1 // pred_fallthru
      _
    %v73 = vld [vmem:[#allocation8] sm:$0xff]
    %v74 = vld [vmem:[#allocation8 + $0x8] sm:$0xff]
    %v75 = vld [vmem:[#allocation9] sm:$0xff]
    %v76 = vld [vmem:[#allocation9 + $0x8] sm:$0xff]
    %77 = vst [vmem:[#allocation2] sm:$0xff] %v73
    %78 = vst [vmem:[#allocation2 + $0x8] sm:$0xff] %v74
    %79 = vst [vmem:[#allocation2 + $0x10] sm:$0xff] %v75
    %80 = vst [vmem:[#allocation2 + $0x18] sm:$0xff] %v76
    %v81 = vmul.f32 %v73, %v73
    %v82 = vmul.f32 %v74, %v74
    %83 = vst [vmem:[#allocation2 + $0x20] sm:$0xff] %v81
    %84 = vst [vmem:[#allocation2 + $0x28] sm:$0xff] %v82
    %v85 = vmul.f32 %v75, %v75
    %v86 = vmul.f32 %v76, %v76
    %87 = vst [vmem:[#allocation2 + $0x30] sm:$0xff] %v85
    %88 = vst [vmem:[#allocation2 + $0x38] sm:$0xff] %v86
    %v89 = vmul.f32 %v73, %v75
    %v90 = vmul.f32 %v74, %v76
    %91 = vst [vmem:[#allocation2 + $0x40] sm:$0xff] %v89
    %92 = vst [vmem:[#allocation2 + $0x48] sm:$0xff] %v90
    %v93 = vld [vmem:[#allocation2] sm:$0xff]
    %v94 = vld [vmem:[#allocation2 + $0x8] sm:$0xff]
    %v95 = vld [vmem:[#allocation2 + $0x10] sm:$0xff]
    %v96 = vld [vmem:[#allocation2 + $0x18] sm:$0xff]
    %v97 = vld [vmem:[#allocation2 + $0x20] sm:$0xff]
    %v98 = vld [vmem:[#allocation2 + $0x28] sm:$0xff]
    %v99 = vld [vmem:[#allocation2 + $0x30] sm:$0xff]
    %v100 = vld [vmem:[#allocation2 + $0x38] sm:$0xff]
    %v101 = vld [vmem:[#allocation2 + $0x40] sm:$0xff]
    %v102 = vld [vmem:[#allocation2 + $0x48] sm:$0xff]
    %v103 = vld [vmem:[#allocation3] sm:$0xff]
    %v104 = vld [vmem:[#allocation3 + $0x8] sm:$0xff]
    %v105 = vld [vmem:[#allocation3 + $0x10] sm:$0xff]
    %v106 = vld [vmem:[#allocation3 + $0x18] sm:$0xff]
    %v107 = vld [vmem:[#allocation3 + $0x20] sm:$0xff]
    %v108 = vld [vmem:[#allocation3 + $0x28] sm:$0xff]
    %v109 = vld [vmem:[#allocation3 + $0x30] sm:$0xff]
    %v110 = vld [vmem:[#allocation3 + $0x38] sm:$0xff]
    %v111 = vld [vmem:[#allocation3 + $0x40] sm:$0xff]
    %v112 = vld [vmem:[#allocation3 + $0x48] sm:$0xff]
    %v113 = vld [vmem:[#allocation3 + $0x50] sm:$0xff]
    %v114 = vld [vmem:[#allocation3 + $0x58] sm:$0xff]
    %v115 = vld [vmem:[#allocation3 + $0x60] sm:$0xff]
    %v116 = vld [vmem:[#allocation3 + $0x68] sm:$0xff]
    %v117 = vld [vmem:[#allocation3 + $0x70] sm:$0xff]
    %v118 = vld [vmem:[#allocation3 + $0x78] sm:$0xff]
    %119 = vmatprep.subr.mxu0 0.0
    %120 = vmatpush1.msra.mxu0 %v103
    %121 = vmatprep.subr.mxu0 0.0
    %122 = vmatpush1.msra.mxu0 %v104
    %123 = vmatprep.subr.mxu0 0.0
    %124 = vmatpush1.msra.mxu0 %v105
    %125 = vmatprep.subr.mxu0 0.0
    %126 = vmatpush1.msra.mxu0 %v106
    %127 = vmatprep.subr.mxu0 0.0
    %128 = vmatpush1.msra.mxu0 %v107
    %129 = vmatprep.subr.mxu0 0.0
    %130 = vmatpush1.msra.mxu0 %v108
    %131 = vmatprep.subr.mxu0 0.0
    %132 = vmatpush1.msra.mxu0 %v109
    %133 = vmatprep.subr.mxu0 0.0
    %134 = vmatpush1.msra.mxu0 %v110
    %135 = vmatprep.subr.mxu0 0.0
    %136 = vmatpush1.msra.mxu0 %v111
    %137 = vmatprep.subr.mxu0 0.0
    %138 = vmatpush1.msra.mxu0 %v112
    %139 = vmatprep.subr.mxu0 0.0
    %140 = vmatpush1.msra.mxu0 %v113
    %141 = vmatprep.subr.mxu0 0.0
    %142 = vmatpush1.msra.mxu0 %v114
    %143 = vmatprep.subr.mxu0 0.0
    %144 = vmatpush1.msra.mxu0 %v115
    %145 = vmatprep.subr.mxu0 0.0
    %146 = vmatpush1.msra.mxu0 %v116
    %147 = vmatprep.subr.mxu0 0.0
    %148 = vmatpush1.msra.mxu0 %v117
    %149 = vmatprep.subr.mxu0 0.0
    %150 = vmatpush1.msra.mxu0 %v118
    %151 = vmatprep.subr.mxu0 0.0
    %152 = vmatpush1.msra.mxu0 0.0
    %153 = vmatprep.subr.mxu0 0.0
    %154 = vmatpush1.msra.mxu0 0.0
    %155 = vmatprep.subr.mxu0 0.0
    %156 = vmatpush1.msra.mxu0 0.0
    %157 = vmatprep.subr.mxu0 0.0
    %158 = vmatpush1.msra.mxu0 0.0
    %159 = vmatprep.subr.mxu0 0.0
    %160 = vmatpush1.msra.mxu0 0.0
    %161 = vmatprep.subr.mxu0 0.0
    %162 = vmatpush1.msra.mxu0 0.0
    %163 = vmatprep.subr.mxu0 0.0
    %164 = vmatpush1.msra.mxu0 0.0
    %165 = vmatprep.subr.mxu0 0.0
    %166 = vmatpush1.msra.mxu0 0.0
    %167 = vmatprep.subr.mxu0 0.0
    %168 = vmatpush1.msra.mxu0 0.0
    %169 = vmatprep.subr.mxu0 0.0
    %170 = vmatpush1.msra.mxu0 0.0
    %171 = vmatprep.subr.mxu0 0.0
    %172 = vmatpush1.msra.mxu0 0.0
    %173 = vmatprep.subr.mxu0 0.0
    %174 = vmatpush1.msra.mxu0 0.0
    %175 = vmatprep.subr.mxu0 0.0
    %176 = vmatpush1.msra.mxu0 0.0
    %177 = vmatprep.subr.mxu0 0.0
    %178 = vmatpush1.msra.mxu0 0.0
    %179 = vmatprep.subr.mxu0 0.0
    %180 = vmatpush1.msra.mxu0 0.0
    %181 = vmatprep.subr.mxu0 0.0
    %182 = vmatpush1.msra.mxu0 0.0
    %183 = vmatprep.mubr.f32.mxu0 0.0
    %184 = vmatmul.mubr.f32.gmra.mrb[0].mxu0 %v93
    %v185 = vpop.f32.mrb[0].mxu0
    %v186 = vadd.f32 0.0, %v185
    %v187 = vpop.f32.mrb[0].mxu0
    %188 = vmatprep.mubr.f32.mxu0 0.0
    %189 = vmatmul.mubr.f32.gmra.mrb[0].mxu0 %v94
    %v190 = vpop.f32.mrb[0].mxu0
    %v191 = vadd.f32 0.0, %v190
    %v192 = vpop.f32.mrb[0].mxu0
    %193 = vmatprep.mubr.f32.mxu0 0.0
    %194 = vmatmul.mubr.f32.gmra.mrb[0].mxu0 %v95
    %v195 = vpop.f32.mrb[0].mxu0
    %v196 = vadd.f32 0.0, %v195
    %v197 = vpop.f32.mrb[0].mxu0
    %198 = vmatprep.mubr.f32.mxu0 0.0
    %199 = vmatmul.mubr.f32.gmra.mrb[0].mxu0 %v96
    %v200 = vpop.f32.mrb[0].mxu0
    %v201 = vadd.f32 0.0, %v200
    %v202 = vpop.f32.mrb[0].mxu0
    %203 = vmatprep.mubr.f32.mxu0 0.0
    %204 = vmatmul.mubr.f32.gmra.mrb[0].mxu0 %v97
    %v205 = vpop.f32.mrb[0].mxu0
    %v206 = vadd.f32 0.0, %v205
    %v207 = vpop.f32.mrb[0].mxu0
    %208 = vmatprep.mubr.f32.mxu0 0.0
    %209 = vmatmul.mubr.f32.gmra.mrb[0].mxu0 %v98
    %v210 = vpop.f32.mrb[0].mxu0
    %v211 = vadd.f32 0.0, %v210
    %v212 = vpop.f32.mrb[0].mxu0
    %213 = vmatprep.mubr.f32.mxu0 0.0
    %214 = vmatmul.mubr.f32.gmra.mrb[0].mxu0 %v99
    %v215 = vpop.f32.mrb[0].mxu0
    %v216 = vadd.f32 0.0, %v215
    %v217 = vpop.f32.mrb[0].mxu0
    %218 = vmatprep.mubr.f32.mxu0 0.0
    %219 = vmatmul.mubr.f32.gmra.mrb[0].mxu0 %v100
    %v220 = vpop.f32.mrb[0].mxu0
    %v221 = vadd.f32 0.0, %v220
    %v222 = vpop.f32.mrb[0].mxu0
    %223 = vmatprep.mubr.f32.mxu0 0.0
    %224 = vmatmul.mubr.f32.gmra.mrb[0].mxu0 %v101
    %v225 = vpop.f32.mrb[0].mxu0
    %v226 = vadd.f32 0.0, %v225
    %v227 = vpop.f32.mrb[0].mxu0
    %228 = vmatprep.mubr.f32.mxu0 0.0
    %229 = vmatmul.mubr.f32.gmra.mrb[0].mxu0 %v102
    %v230 = vpop.f32.mrb[0].mxu0
    %v231 = vadd.f32 0.0, %v230
    %v232 = vpop.f32.mrb[0].mxu0
    %233 = vdwg.mxu0
    %v234 = vld [vmem:[#allocation6] sm:$0xff]
    %v235 = vld [vmem:[#allocation6 + $0x8] sm:$0xff]
    %vm236 = vcmask 130048
    %v238 = vsel %vm236, %v234, 0
    %v241 = vsel %vm236, %v235, 0
    %243 = vmatprep.subr.mxu0 0.0
    %244 = vmatpush1.msra.mxu0 %v186
    %245 = vmatprep.subr.mxu0 0.0
    %246 = vmatpush1.msra.mxu0 %v191
    %247 = vmatprep.subr.mxu0 0.0
    %248 = vmatpush1.msra.mxu0 0.0
    %249 = vmatprep.subr.mxu0 0.0
    %250 = vmatpush1.msra.mxu0 0.0
    %251 = vmatprep.subr.mxu0 0.0
    %252 = vmatpush1.msra.mxu0 0.0
    %253 = vmatprep.subr.mxu0 0.0
    %254 = vmatpush1.msra.mxu0 0.0
    %255 = vmatprep.subr.mxu0 0.0
    %256 = vmatpush1.msra.mxu0 0.0
    %257 = vmatprep.subr.mxu0 0.0
    %258 = vmatpush1.msra.mxu0 0.0
    %259 = vmatprep.subr.mxu0 0.0
    %260 = vmatpush1.msra.mxu0 0.0
    %261 = vmatprep.subr.mxu0 0.0
    %262 = vmatpush1.msra.mxu0 0.0
    %263 = vmatprep.subr.mxu0 0.0
    %264 = vmatpush1.msra.mxu0 0.0
    %265 = vmatprep.subr.mxu0 0.0
    %266 = vmatpush1.msra.mxu0 0.0
    %267 = vmatprep.subr.mxu0 0.0
    %268 = vmatpush1.msra.mxu0 0.0
    %269 = vmatprep.subr.mxu0 0.0
    %270 = vmatpush1.msra.mxu0 0.0
    %271 = vmatprep.subr.mxu0 0.0
    %272 = vmatpush1.msra.mxu0 0.0
    %273 = vmatprep.subr.mxu0 0.0
    %274 = vmatpush1.msra.mxu0 0.0
    %275 = vmatprep.subr.mxu0 0.0
    %276 = vmatpush1.msra.mxu0 0.0
    %277 = vmatprep.subr.mxu0 0.0
    %278 = vmatpush1.msra.mxu0 0.0
    %279 = vmatprep.subr.mxu0 0.0
    %280 = vmatpush1.msra.mxu0 0.0
    %281 = vmatprep.subr.mxu0 0.0
    %282 = vmatpush1.msra.mxu0 0.0
    %283 = vmatprep.subr.mxu0 0.0
    %284 = vmatpush1.msra.mxu0 0.0
    %285 = vmatprep.subr.mxu0 0.0
    %286 = vmatpush1.msra.mxu0 0.0
    %287 = vmatprep.subr.mxu0 0.0
    %288 = vmatpush1.msra.mxu0 0.0
    %289 = vmatprep.subr.mxu0 0.0
    %290 = vmatpush1.msra.mxu0 0.0
    %291 = vmatprep.subr.mxu0 0.0
    %292 = vmatpush1.msra.mxu0 0.0
    %293 = vmatprep.subr.mxu0 0.0
    %294 = vmatpush1.msra.mxu0 0.0
    %295 = vmatprep.subr.mxu0 0.0
    %296 = vmatpush1.msra.mxu0 0.0
    %297 = vmatprep.subr.mxu0 0.0
    %298 = vmatpush1.msra.mxu0 0.0
    %299 = vmatprep.subr.mxu0 0.0
    %300 = vmatpush1.msra.mxu0 0.0
    %301 = vmatprep.subr.mxu0 0.0
    %302 = vmatpush1.msra.mxu0 0.0
    %303 = vmatprep.subr.mxu0 0.0
    %304 = vmatpush1.msra.mxu0 0.0
    %305 = vmatprep.subr.mxu0 0.0
    %306 = vmatpush1.msra.mxu0 0.0
    %307 = vmatprep.mubr.f32.mxu0 0.0
    %308 = vmatmul.mubr.f32.gmra.mrb[0].mxu0 %v238
    %v309 = vpop.f32.mrb[0].mxu0
    %v310 = vadd.f32 0.0, %v309
    %v311 = vpop.f32.mrb[0].mxu0
    %312 = vmatprep.mubr.f32.mxu0 0.0
    %313 = vmatmul.mubr.f32.gmra.mrb[0].mxu0 %v241
    %v314 = vpop.f32.mrb[0].mxu0
    %v315 = vadd.f32 0.0, %v314
    %v316 = vpop.f32.mrb[0].mxu0
    %317 = vdwg.mxu0
    %318 = vmatprep.subr.mxu0 0.0
    %319 = vmatpush1.msra.mxu0 %v196
    %320 = vmatprep.subr.mxu0 0.0
    %321 = vmatpush1.msra.mxu0 %v201
    %322 = vmatprep.subr.mxu0 0.0
    %323 = vmatpush1.msra.mxu0 0.0
    %324 = vmatprep.subr.mxu0 0.0
    %325 = vmatpush1.msra.mxu0 0.0
    %326 = vmatprep.subr.mxu0 0.0
    %327 = vmatpush1.msra.mxu0 0.0
    %328 = vmatprep.subr.mxu0 0.0
    %329 = vmatpush1.msra.mxu0 0.0
    %330 = vmatprep.subr.mxu0 0.0
    %331 = vmatpush1.msra.mxu0 0.0
    %332 = vmatprep.subr.mxu0 0.0
    %333 = vmatpush1.msra.mxu0 0.0
    %334 = vmatprep.subr.mxu0 0.0
    %335 = vmatpush1.msra.mxu0 0.0
    %336 = vmatprep.subr.mxu0 0.0
    %337 = vmatpush1.msra.mxu0 0.0
    %338 = vmatprep.subr.mxu0 0.0
    %339 = vmatpush1.msra.mxu0 0.0
    %340 = vmatprep.subr.mxu0 0.0
    %341 = vmatpush1.msra.mxu0 0.0
    %342 = vmatprep.subr.mxu0 0.0
    %343 = vmatpush1.msra.mxu0 0.0
    %344 = vmatprep.subr.mxu0 0.0
    %345 = vmatpush1.msra.mxu0 0.0
    %346 = vmatprep.subr.mxu0 0.0
    %347 = vmatpush1.msra.mxu0 0.0
    %348 = vmatprep.subr.mxu0 0.0
    %349 = vmatpush1.msra.mxu0 0.0
    %350 = vmatprep.subr.mxu0 0.0
    %351 = vmatpush1.msra.mxu0 0.0
    %352 = vmatprep.subr.mxu0 0.0
    %353 = vmatpush1.msra.mxu0 0.0
    %354 = vmatprep.subr.mxu0 0.0
    %355 = vmatpush1.msra.mxu0 0.0
    %356 = vmatprep.subr.mxu0 0.0
    %357 = vmatpush1.msra.mxu0 0.0
    %358 = vmatprep.subr.mxu0 0.0
    %359 = vmatpush1.msra.mxu0 0.0
    %360 = vmatprep.subr.mxu0 0.0
    %361 = vmatpush1.msra.mxu0 0.0
    %362 = vmatprep.subr.mxu0 0.0
    %363 = vmatpush1.msra.mxu0 0.0
    %364 = vmatprep.subr.mxu0 0.0
    %365 = vmatpush1.msra.mxu0 0.0
    %366 = vmatprep.subr.mxu0 0.0
    %367 = vmatpush1.msra.mxu0 0.0
    %368 = vmatprep.subr.mxu0 0.0
    %369 = vmatpush1.msra.mxu0 0.0
    %370 = vmatprep.subr.mxu0 0.0
    %371 = vmatpush1.msra.mxu0 0.0
    %372 = vmatprep.subr.mxu0 0.0
    %373 = vmatpush1.msra.mxu0 0.0
    %374 = vmatprep.subr.mxu0 0.0
    %375 = vmatpush1.msra.mxu0 0.0
    %376 = vmatprep.subr.mxu0 0.0
    %377 = vmatpush1.msra.mxu0 0.0
    %378 = vmatprep.subr.mxu0 0.0
    %379 = vmatpush1.msra.mxu0 0.0
    %380 = vmatprep.subr.mxu0 0.0
    %381 = vmatpush1.msra.mxu0 0.0
    %382 = vmatprep.mubr.f32.mxu0 0.0
    %383 = vmatmul.mubr.f32.gmra.mrb[0].mxu0 %v238
    %v384 = vpop.f32.mrb[0].mxu0
    %v385 = vadd.f32 0.0, %v384
    %v386 = vpop.f32.mrb[0].mxu0
    %387 = vmatprep.mubr.f32.mxu0 0.0
    %388 = vmatmul.mubr.f32.gmra.mrb[0].mxu0 %v241
    %v389 = vpop.f32.mrb[0].mxu0
    %v390 = vadd.f32 0.0, %v389
    %v391 = vpop.f32.mrb[0].mxu0
    %392 = vdwg.mxu0
    %393 = vmatprep.subr.mxu0 0.0
    %394 = vmatpush1.msra.mxu0 %v206
    %395 = vmatprep.subr.mxu0 0.0
    %396 = vmatpush1.msra.mxu0 %v211
    %397 = vmatprep.subr.mxu0 0.0
    %398 = vmatpush1.msra.mxu0 0.0
    %399 = vmatprep.subr.mxu0 0.0
    %400 = vmatpush1.msra.mxu0 0.0
    %401 = vmatprep.subr.mxu0 0.0
    %402 = vmatpush1.msra.mxu0 0.0
    %403 = vmatprep.subr.mxu0 0.0
    %404 = vmatpush1.msra.mxu0 0.0
    %405 = vmatprep.subr.mxu0 0.0
    %406 = vmatpush1.msra.mxu0 0.0
    %407 = vmatprep.subr.mxu0 0.0
    %408 = vmatpush1.msra.mxu0 0.0
    %409 = vmatprep.subr.mxu0 0.0
    %410 = vmatpush1.msra.mxu0 0.0
    %411 = vmatprep.subr.mxu0 0.0
    %412 = vmatpush1.msra.mxu0 0.0
    %413 = vmatprep.subr.mxu0 0.0
    %414 = vmatpush1.msra.mxu0 0.0
    %415 = vmatprep.subr.mxu0 0.0
    %416 = vmatpush1.msra.mxu0 0.0
    %417 = vmatprep.subr.mxu0 0.0
    %418 = vmatpush1.msra.mxu0 0.0
    %419 = vmatprep.subr.mxu0 0.0
    %420 = vmatpush1.msra.mxu0 0.0
    %421 = vmatprep.subr.mxu0 0.0
    %422 = vmatpush1.msra.mxu0 0.0
    %423 = vmatprep.subr.mxu0 0.0
    %424 = vmatpush1.msra.mxu0 0.0
    %425 = vmatprep.subr.mxu0 0.0
    %426 = vmatpush1.msra.mxu0 0.0
    %427 = vmatprep.subr.mxu0 0.0
    %428 = vmatpush1.msra.mxu0 0.0
    %429 = vmatprep.subr.mxu0 0.0
    %430 = vmatpush1.msra.mxu0 0.0
    %431 = vmatprep.subr.mxu0 0.0
    %432 = vmatpush1.msra.mxu0 0.0
    %433 = vmatprep.subr.mxu0 0.0
    %434 = vmatpush1.msra.mxu0 0.0
    %435 = vmatprep.subr.mxu0 0.0
    %436 = vmatpush1.msra.mxu0 0.0
    %437 = vmatprep.subr.mxu0 0.0
    %438 = vmatpush1.msra.mxu0 0.0
    %439 = vmatprep.subr.mxu0 0.0
    %440 = vmatpush1.msra.mxu0 0.0
    %441 = vmatprep.subr.mxu0 0.0
    %442 = vmatpush1.msra.mxu0 0.0
    %443 = vmatprep.subr.mxu0 0.0
    %444 = vmatpush1.msra.mxu0 0.0
    %445 = vmatprep.subr.mxu0 0.0
    %446 = vmatpush1.msra.mxu0 0.0
    %447 = vmatprep.subr.mxu0 0.0
    %448 = vmatpush1.msra.mxu0 0.0
    %449 = vmatprep.subr.mxu0 0.0
    %450 = vmatpush1.msra.mxu0 0.0
    %451 = vmatprep.subr.mxu0 0.0
    %452 = vmatpush1.msra.mxu0 0.0
    %453 = vmatprep.subr.mxu0 0.0
    %454 = vmatpush1.msra.mxu0 0.0
    %455 = vmatprep.subr.mxu0 0.0
    %456 = vmatpush1.msra.mxu0 0.0
    %457 = vmatprep.mubr.f32.mxu0 0.0
    %458 = vmatmul.mubr.f32.gmra.mrb[0].mxu0 %v238
    %v459 = vpop.f32.mrb[0].mxu0
    %v460 = vadd.f32 0.0, %v459
    %v461 = vpop.f32.mrb[0].mxu0
    %462 = vmatprep.mubr.f32.mxu0 0.0
    %463 = vmatmul.mubr.f32.gmra.mrb[0].mxu0 %v241
    %v464 = vpop.f32.mrb[0].mxu0
    %v465 = vadd.f32 0.0, %v464
    %v466 = vpop.f32.mrb[0].mxu0
    %467 = vdwg.mxu0
    %468 = vmatprep.subr.mxu0 0.0
    %469 = vmatpush1.msra.mxu0 %v216
    %470 = vmatprep.subr.mxu0 0.0
    %471 = vmatpush1.msra.mxu0 %v221
    %472 = vmatprep.subr.mxu0 0.0
    %473 = vmatpush1.msra.mxu0 0.0
    %474 = vmatprep.subr.mxu0 0.0
    %475 = vmatpush1.msra.mxu0 0.0
    %476 = vmatprep.subr.mxu0 0.0
    %477 = vmatpush1.msra.mxu0 0.0
    %478 = vmatprep.subr.mxu0 0.0
    %479 = vmatpush1.msra.mxu0 0.0
    %480 = vmatprep.subr.mxu0 0.0
    %481 = vmatpush1.msra.mxu0 0.0
    %482 = vmatprep.subr.mxu0 0.0
    %483 = vmatpush1.msra.mxu0 0.0
    %484 = vmatprep.subr.mxu0 0.0
    %485 = vmatpush1.msra.mxu0 0.0
    %486 = vmatprep.subr.mxu0 0.0
    %487 = vmatpush1.msra.mxu0 0.0
    %488 = vmatprep.subr.mxu0 0.0
    %489 = vmatpush1.msra.mxu0 0.0
    %490 = vmatprep.subr.mxu0 0.0
    %491 = vmatpush1.msra.mxu0 0.0
    %492 = vmatprep.subr.mxu0 0.0
    %493 = vmatpush1.msra.mxu0 0.0
    %494 = vmatprep.subr.mxu0 0.0
    %495 = vmatpush1.msra.mxu0 0.0
    %496 = vmatprep.subr.mxu0 0.0
    %497 = vmatpush1.msra.mxu0 0.0
    %498 = vmatprep.subr.mxu0 0.0
    %499 = vmatpush1.msra.mxu0 0.0
    %500 = vmatprep.subr.mxu0 0.0
    %501 = vmatpush1.msra.mxu0 0.0
    %502 = vmatprep.subr.mxu0 0.0
    %503 = vmatpush1.msra.mxu0 0.0
    %504 = vmatprep.subr.mxu0 0.0
    %505 = vmatpush1.msra.mxu0 0.0
    %506 = vmatprep.subr.mxu0 0.0
    %507 = vmatpush1.msra.mxu0 0.0
    %508 = vmatprep.subr.mxu0 0.0
    %509 = vmatpush1.msra.mxu0 0.0
    %510 = vmatprep.subr.mxu0 0.0
    %511 = vmatpush1.msra.mxu0 0.0
    %512 = vmatprep.subr.mxu0 0.0
    %513 = vmatpush1.msra.mxu0 0.0
    %514 = vmatprep.subr.mxu0 0.0
    %515 = vmatpush1.msra.mxu0 0.0
    %516 = vmatprep.subr.mxu0 0.0
    %517 = vmatpush1.msra.mxu0 0.0
    %518 = vmatprep.subr.mxu0 0.0
    %519 = vmatpush1.msra.mxu0 0.0
    %520 = vmatprep.subr.mxu0 0.0
    %521 = vmatpush1.msra.mxu0 0.0
    %522 = vmatprep.subr.mxu0 0.0
    %523 = vmatpush1.msra.mxu0 0.0
    %524 = vmatprep.subr.mxu0 0.0
    %525 = vmatpush1.msra.mxu0 0.0
    %526 = vmatprep.subr.mxu0 0.0
    %527 = vmatpush1.msra.mxu0 0.0
    %528 = vmatprep.subr.mxu0 0.0
    %529 = vmatpush1.msra.mxu0 0.0
    %530 = vmatprep.subr.mxu0 0.0
    %531 = vmatpush1.msra.mxu0 0.0
    %532 = vmatprep.mubr.f32.mxu0 0.0
    %533 = vmatmul.mubr.f32.gmra.mrb[0].mxu0 %v238
    %v534 = vpop.f32.mrb[0].mxu0
    %v535 = vadd.f32 0.0, %v534
    %v536 = vpop.f32.mrb[0].mxu0
    %537 = vmatprep.mubr.f32.mxu0 0.0
    %538 = vmatmul.mubr.f32.gmra.mrb[0].mxu0 %v241
    %v539 = vpop.f32.mrb[0].mxu0
    %v540 = vadd.f32 0.0, %v539
    %v541 = vpop.f32.mrb[0].mxu0
    %542 = vdwg.mxu0
    %543 = vmatprep.subr.mxu0 0.0
    %544 = vmatpush1.msra.mxu0 %v226
    %545 = vmatprep.subr.mxu0 0.0
    %546 = vmatpush1.msra.mxu0 %v231
    %547 = vmatprep.subr.mxu0 0.0
    %548 = vmatpush1.msra.mxu0 0.0
    %549 = vmatprep.subr.mxu0 0.0
    %550 = vmatpush1.msra.mxu0 0.0
    %551 = vmatprep.subr.mxu0 0.0
    %552 = vmatpush1.msra.mxu0 0.0
    %553 = vmatprep.subr.mxu0 0.0
    %554 = vmatpush1.msra.mxu0 0.0
    %555 = vmatprep.subr.mxu0 0.0
    %556 = vmatpush1.msra.mxu0 0.0
    %557 = vmatprep.subr.mxu0 0.0
    %558 = vmatpush1.msra.mxu0 0.0
    %559 = vmatprep.subr.mxu0 0.0
    %560 = vmatpush1.msra.mxu0 0.0
    %561 = vmatprep.subr.mxu0 0.0
    %562 = vmatpush1.msra.mxu0 0.0
    %563 = vmatprep.subr.mxu0 0.0
    %564 = vmatpush1.msra.mxu0 0.0
    %565 = vmatprep.subr.mxu0 0.0
    %566 = vmatpush1.msra.mxu0 0.0
    %567 = vmatprep.subr.mxu0 0.0
    %568 = vmatpush1.msra.mxu0 0.0
    %569 = vmatprep.subr.mxu0 0.0
    %570 = vmatpush1.msra.mxu0 0.0
    %571 = vmatprep.subr.mxu0 0.0
    %572 = vmatpush1.msra.mxu0 0.0
    %573 = vmatprep.subr.mxu0 0.0
    %574 = vmatpush1.msra.mxu0 0.0
    %575 = vmatprep.subr.mxu0 0.0
    %576 = vmatpush1.msra.mxu0 0.0
    %577 = vmatprep.subr.mxu0 0.0
    %578 = vmatpush1.msra.mxu0 0.0
    %579 = vmatprep.subr.mxu0 0.0
    %580 = vmatpush1.msra.mxu0 0.0
    %581 = vmatprep.subr.mxu0 0.0
    %582 = vmatpush1.msra.mxu0 0.0
    %583 = vmatprep.subr.mxu0 0.0
    %584 = vmatpush1.msra.mxu0 0.0
    %585 = vmatprep.subr.mxu0 0.0
    %586 = vmatpush1.msra.mxu0 0.0
    %587 = vmatprep.subr.mxu0 0.0
    %588 = vmatpush1.msra.mxu0 0.0
    %589 = vmatprep.subr.mxu0 0.0
    %590 = vmatpush1.msra.mxu0 0.0
    %591 = vmatprep.subr.mxu0 0.0
    %592 = vmatpush1.msra.mxu0 0.0
    %593 = vmatprep.subr.mxu0 0.0
    %594 = vmatpush1.msra.mxu0 0.0
    %595 = vmatprep.subr.mxu0 0.0
    %596 = vmatpush1.msra.mxu0 0.0
    %597 = vmatprep.subr.mxu0 0.0
    %598 = vmatpush1.msra.mxu0 0.0
    %599 = vmatprep.subr.mxu0 0.0
    %600 = vmatpush1.msra.mxu0 0.0
    %601 = vmatprep.subr.mxu0 0.0
    %602 = vmatpush1.msra.mxu0 0.0
    %603 = vmatprep.subr.mxu0 0.0
    %604 = vmatpush1.msra.mxu0 0.0
    %605 = vmatprep.subr.mxu0 0.0
    %606 = vmatpush1.msra.mxu0 0.0
    %607 = vmatprep.mubr.f32.mxu0 0.0
    %608 = vmatmul.mubr.f32.gmra.mrb[0].mxu0 %v238
    %v609 = vpop.f32.mrb[0].mxu0
    %v610 = vadd.f32 0.0, %v609
    %v611 = vpop.f32.mrb[0].mxu0
    %612 = vmatprep.mubr.f32.mxu0 0.0
    %613 = vmatmul.mubr.f32.gmra.mrb[0].mxu0 %v241
    %v614 = vpop.f32.mrb[0].mxu0
    %v615 = vadd.f32 0.0, %v614
    %v616 = vpop.f32.mrb[0].mxu0
    %617 = vdwg.mxu0
    %v618 = vmul.f32 %v310, %v310
    %v619 = vmul.f32 %v315, %v315
    %v620 = vmul.f32 %v385, %v385
    %v621 = vmul.f32 %v390, %v390
    %v622 = vmul.f32 %v310, %v385
    %v623 = vmul.f32 %v315, %v390
    %v624 = vsub.f32 %v460, %v618
    %v625 = vsub.f32 %v465, %v619
    %v626 = vsub.f32 %v535, %v620
    %v627 = vsub.f32 %v540, %v621
    %v628 = vsub.f32 %v610, %v622
    %v629 = vsub.f32 %v615, %v623
    %v630 = vmul.f32 %v622, 2.0
    %v631 = vmul.f32 %v623, 2.0
    %v632 = vadd.f32 %v630, 0.0001
    %v633 = vadd.f32 %v631, 0.0001
    %v634 = vmul.f32 %v628, 2.0
    %v635 = vmul.f32 %v629, 2.0
    %v636 = vadd.f32 %v634, 0.0009
    %v637 = vadd.f32 %v635, 0.0009
    %v638 = vmul.f32 %v632, %v636
    %v639 = vmul.f32 %v633, %v637
    %v640 = vadd.f32 %v618, %v620
    %v641 = vadd.f32 %v619, %v621
    %v642 = vadd.f32 %v640, 0.0001
    %v643 = vadd.f32 %v641, 0.0001
    %v644 = vadd.f32 %v624, %v626
    %v645 = vadd.f32 %v625, %v627
    %v646 = vadd.f32 %v644, 0.0009
    %v647 = vadd.f32 %v645, 0.0009
    %v648 = vmul.f32 %v642, %v646
    %v649 = vmul.f32 %v643, %v647
    %v650 = vrcp.pop %v648
    %v651 = vrcp.pop %v649
    %v652 = vmul.f32 %v648, %v650
    %v653 = vmul.f32 %v649, %v651
    %v654 = vsub.f32 2.0, %v652
    %v655 = vsub.f32 2.0, %v653
    %v656 = vmul.f32 %v650, %v654
    %v657 = vmul.f32 %v651, %v655
    %v658 = vmul.f32 %v638, %v656
    %v659 = vmul.f32 %v639, %v657
    %v660 = vadd.f32 %v658, %v659
    %661 = vadd.xlane.f32.xlu0 %v660
    %v662 = vpop.xlane.xlu0 %661
    %v663 = vrot.slane %v662, 4
    %v664 = vadd.f32 %v662, %v663
    %v665 = vrot.slane %v664, 2
    %v666 = vadd.f32 %v664, %v665
    %v667 = vrot.slane %v666, 1
    %v668 = vadd.f32 %v666, %v667
    %s669 = vtos %v668
    %s670 = sadd.f32 %s669, 0.0
    %v671 = vstv %s670
    %672 = vst [vmem:[#allocation11] sm:$0xff] %v671
    // Predicated region
    $region34: #{tpu_custom_call.1} parent=1 // pred_check
      _
    $region35: #{tpu_custom_call.1} parent=1 // pred_check_branch
      %674 = sbr.rel (0) target = $region37
    $region36: #{tpu_custom_call.1} parent=1 // pred_region
      %s676 = ssub.s32 128, 128
      %677 = vsyncadd [#allocation5], %s676
      %s679 = sshll.u32 [#allocation11], 4
      %s680 = int_to_ptr.vmem [resolvable:$true] %s679
      %682 = dma.vmem_to_hbm [thread:$0]  %s680, 128, %s4, [#allocation5]
    $region37: #{tpu_custom_call.1} parent=1 // pred_fallthru
      _
    // Predicated region
    $region38: #{tpu_custom_call.1} parent=1 // pred_check
      _
    $region39: #{tpu_custom_call.1} parent=1 // pred_check_branch
      %684 = sbr.rel (0) target = $region41
    $region40: #{tpu_custom_call.1} parent=1 // pred_region
      %685 = dma.done [#allocation5], 128
    $region41: #{tpu_custom_call.1} parent=1 // pred_fallthru
      _
    %686 = vsyncpa [#allocation4], 1
    %687 = vsyncpa [#allocation7], 1
    %688 = vsyncpa [#allocation10], 1
    %689 = vsyncpa [#allocation5], 1

</llo_original>
